<compile_context>
chip_gen: v5e
topology: v5e:2x2
jax: 0.10.0
libtpu: 0.0.40
codegen_flags: <defaults>
</compile_context>

<pallas_src>
import math

import jax
import jax.numpy as jnp
from jax.experimental import pallas as pl
from jax.experimental.pallas import tpu as pltpu

_PI = math.pi


def _periodic_boundary_kernel(coord_ref, out_ref):
    c = coord_ref[...]                                   # (D, TILE_R, LANES)
    d = c.shape[0]
    x = c[0].astype(jnp.float32) * _PI                   # full (8,128)-dense vregs
    y = c[1].astype(jnp.float32) * _PI
    trig = jnp.stack(
        [jnp.sin(x), jnp.cos(x), jnp.sin(y), jnp.cos(y)], axis=0
    ).astype(out_ref.dtype)                              # (4, TILE_R, LANES)
    if d > 2:
        enc = jnp.concatenate([trig, c[2:].astype(out_ref.dtype)], axis=0)
    else:
        enc = trig
    out_ref[...] = enc                                   # single unmasked full-block store


def periodic_boundary(coord, *, lanes=128, max_tile_rows=512):
    """coord: [..., D] (D >= 2) -> [..., D + 2]."""
    *lead, D = coord.shape
    assert D >= 2, "PeriodicBoundary needs at least (x, y) coordinates"
    dtype = coord.dtype

    N = 1
    for s in lead:
        N *= s

    # Flattened points -> (R x lanes) grid; R padded to a multiple of the row tile.
    rows = pl.cdiv(N, lanes)
    tile_r = min(max_tile_rows, ((rows + 7) // 8) * 8)   # multiple of 8 sublanes
    R = ((rows + tile_r - 1) // tile_r) * tile_r
    n_pad = R * lanes

    flat = coord.reshape(N, D)
    if n_pad != N:
        flat = jnp.pad(flat, ((0, n_pad - N), (0, 0)))
    # Feature-major, lane-dense slab [D, R, lanes] (wrapper-side layout plumbing).
    slab = flat.T.reshape(D, R, lanes)

    out_slab = pl.pallas_call(
        _periodic_boundary_kernel,
        out_shape=jax.ShapeDtypeStruct((D + 2, R, lanes), dtype),
        grid=(R // tile_r,),
        in_specs=[pl.BlockSpec((D, tile_r, lanes), lambda i: (0, i, 0))],
        out_specs=pl.BlockSpec((D + 2, tile_r, lanes), lambda i: (0, i, 0)),
        compiler_params=pltpu.CompilerParams(
            dimension_semantics=("parallel",),           # lets v7x shard across both TCs
        ),
        cost_estimate=pl.CostEstimate(
            flops=2 * n_pad,                             # two scalar*pi multiplies / point
            transcendentals=4 * n_pad,                   # 2x sin + 2x cos / point
            bytes_accessed=(D + D + 2) * n_pad * dtype.itemsize,
        ),
    )(slab)

    out = out_slab.reshape(D + 2, n_pad).T[:N]
    return out.reshape(*lead, D + 2)


if __name__ == "__main__":
    key = jax.random.PRNGKey(0)
    B, S, D = 2, 2048, 3                                 # batch, points, (x, y, t)
    coord = jax.random.normal(key, (B, S, D), dtype=jnp.float32)

    # Small max_tile_rows so the demo exercises a multi-step pipelined grid;
    # production default (512 rows x 128 lanes) is ~4 MiB of double-buffered VMEM.
    out = periodic_boundary(coord, max_tile_rows=8)
    out = jax.block_until_ready(out)

    # Plain-JAX reference of the PyTorch forward.
    sx = coord[..., 0:1] * jnp.pi
    sy = coord[..., 1:2] * jnp.pi
    ref = jnp.concatenate(
        [jnp.sin(sx), jnp.cos(sx), jnp.sin(sy), jnp.cos(sy), coord[..., 2:]], axis=-1
    )

    assert out.shape == (B, S, D + 2)
    assert jnp.allclose(out, ref, atol=1e-5, rtol=1e-5)

    print("KERNEL_OK")
</pallas_src>

<mosaic_0001>
module attributes {stable_mosaic.version = 11 : i64} {
  func.func @_periodic_boundary_kernel(%arg0: i32, %arg1: memref<3x8x128xf32, #tpu.memory_space<vmem>>, %arg2: memref<5x8x128xf32, #tpu.memory_space<vmem>>) attributes {dimension_semantics = [#tpu.dimension_semantics<parallel>], iteration_bounds = array<i64: 4>, scalar_prefetch = 0 : i64, scratch_operands = 0 : i64, tpu.core_type = #tpu.core_type<tc>, window_params = [{transform_indices = @transform_0, window_bounds = array<i64: 3, 8, 128>}, {transform_indices = @transform_1, window_bounds = array<i64: 5, 8, 128>}]} {
    %c0 = arith.constant 0 : index
    %c0_0 = arith.constant 0 : index
    %c0_1 = arith.constant 0 : index
    %0 = vector.load %arg1[%c0, %c0_0, %c0_1] : memref<3x8x128xf32, #tpu.memory_space<vmem>>, vector<3x8x128xf32>
    %1 = vector.extract_strided_slice %0 {offsets = [0, 0, 0], sizes = [1, 8, 128], strides = [1, 1, 1]} : vector<3x8x128xf32> to vector<1x8x128xf32>
    %2 = vector.shape_cast %1 : vector<1x8x128xf32> to vector<8x128xf32>
    %cst = arith.constant 3.14159274 : f32
    %3 = vector.broadcast %cst : f32 to vector<8x128xf32>
    %4 = arith.mulf %2, %3 : vector<8x128xf32>
    %5 = vector.extract_strided_slice %0 {offsets = [1, 0, 0], sizes = [1, 8, 128], strides = [1, 1, 1]} : vector<3x8x128xf32> to vector<1x8x128xf32>
    %6 = vector.shape_cast %5 : vector<1x8x128xf32> to vector<8x128xf32>
    %cst_2 = arith.constant 3.14159274 : f32
    %7 = vector.broadcast %cst_2 : f32 to vector<8x128xf32>
    %8 = arith.mulf %6, %7 : vector<8x128xf32>
    %9 = math.sin %4 : vector<8x128xf32>
    %10 = math.cos %4 : vector<8x128xf32>
    %11 = math.sin %8 : vector<8x128xf32>
    %12 = math.cos %8 : vector<8x128xf32>
    %13 = vector.shape_cast %9 : vector<8x128xf32> to vector<1x8x128xf32>
    %14 = vector.shape_cast %10 : vector<8x128xf32> to vector<1x8x128xf32>
    %15 = vector.shape_cast %11 : vector<8x128xf32> to vector<1x8x128xf32>
    %16 = vector.shape_cast %12 : vector<8x128xf32> to vector<1x8x128xf32>
    %17 = tpu.concatenate %13, %14, %15, %16 in 0 : vector<1x8x128xf32>, vector<1x8x128xf32>, vector<1x8x128xf32>, vector<1x8x128xf32> -> vector<4x8x128xf32>
    %18 = vector.extract_strided_slice %0 {offsets = [2, 0, 0], sizes = [1, 8, 128], strides = [1, 1, 1]} : vector<3x8x128xf32> to vector<1x8x128xf32>
    %19 = tpu.concatenate %17, %18 in 0 : vector<4x8x128xf32>, vector<1x8x128xf32> -> vector<5x8x128xf32>
    %c0_3 = arith.constant 0 : index
    %c0_4 = arith.constant 0 : index
    %c0_5 = arith.constant 0 : index
    %20 = vector.load %arg2[%c0_3, %c0_4, %c0_5] : memref<5x8x128xf32, #tpu.memory_space<vmem>>, vector<5x8x128xf32>
    tpu.vector_store %arg2[%c0_3, %c0_4, %c0_5], %19 {strides = array<i32>} : memref<5x8x128xf32, #tpu.memory_space<vmem>>, vector<5x8x128xf32>,
    return
  }
  func.func @transform_0(%arg0: i32) -> (i32, i32, i32) {
    %c0_i32 = arith.constant 0 : i32
    %c0_i32_0 = arith.constant 0 : i32
    %c0_i32_1 = arith.constant 0 : i32
    return %c0_i32, %arg0, %c0_i32_0 : i32, i32, i32
  }
  func.func @transform_1(%arg0: i32) -> (i32, i32, i32) {
    %c0_i32 = arith.constant 0 : i32
    %c0_i32_0 = arith.constant 0 : i32
    %c0_i32_1 = arith.constant 0 : i32
    return %c0_i32, %arg0, %c0_i32_0 : i32, i32, i32
  }
}

</mosaic_0001>

<llo_original>
// kernel: tpu_custom_call.1
$region0: #{tpu_custom_call.1}
  #allocation0 [shape = 'u32[]', space=smem, size = 0x4, offset = 0x4, fixed_abs, tag = 'smem constant byte address 0x4 - core index']
  #allocation1 [shape = 'u32[72,128]{1,0:T(1,128)}', space=vmem, size = 0x9000, scoped, tag = 'internal scratch']
  %s0 = inlined_call_operand.hbm [shape: f32[3,32,128], index: 0, kind: input, shape index: {}]
  %s1 = inlined_call_operand.hbm [shape: f32[5,32,128], index: 1, kind: output, shape index: {}]
  %s2 = sld [smem:[#allocation0]]
  $region41: #{tpu_custom_call.1} parent=0
    _
  %s4 = ssub.s32 1, %s2
  %s5 = scalar_select 0, %s4, %s2
  $region1: #{tpu_custom_call.1} parent=0
    #allocation2 [shape = 'u8[24576]{0}', space=vmem, size = 0x6000, scoped, tag = 'input window, operand 0']
    #allocation3 [shape = 's32[2]{0}', space=sflag, size = 0x8, scoped, tag = 'scoped memory for tpu_custom_call.1']
    #allocation4 [shape = 's32[2]{0}', space=sflag, size = 0x8, scoped, tag = 'scoped memory for tpu_custom_call.1']
    #allocation5 [shape = 'u8[40960]{0}', space=vmem, size = 0xa000, scoped, tag = 'output window, operand 0']
    %6 = vsyncpa [#allocation3], 0
    %s7 = scalar_lea.sflag [#allocation3], 1
    %8 = vsyncpa %s7, 0
    %9 = vsyncpa [#allocation4], 0
    %s10 = scalar_lea.sflag [#allocation4], 1
    %11 = vsyncpa %s10, 0
    loop: start=0, step=1, limit=6
    $region2: #{tpu_custom_call.1} parent=1 // loop_pre_header
      _
    $region3: #{tpu_custom_call.1} parent=1 // loop_header
      %s13 = sphi 0, %s17
      %p14 = scmp.ge.s32.totalorder %s13, 6
      %s23 = sphi 0, %s25
      %s26 = sphi 0, %s23
      %s27 = sphi 0, %s26
      %s43 = sphi 0, %s27
      %s49 = sphi 0, %s51
      %s52 = sphi 0, %s49
      %s53 = sphi 0, %s52
      %s69 = sphi 0, %s53
    $region4: #{tpu_custom_call.1} parent=1 // loop_header_branch
      %16 = sbr.rel (%p14) target = $region8
    $region5: #{tpu_custom_call.1} parent=1 // loop_body
      %s18 = ssub.s32 %s13, 1
      %s19 = ssub.s32 %s13, 2
      %s20 = sadd.s32 %s13, 1
      %s21 = ssub.s32 %s13, %s20
      %p22 = scmp.eq.s32.totalorder %s21, 0
      %s24 = sadd.s32 %s23, 1
      %s25 = scalar_select %p22, %s23, %s24
      %p28 = pneg %p22
      %p29 = scmp.eq.s32.totalorder %s13, 3
      %p30 = por %p28, %p29
      %p31 = scmp.ne.s32.totalorder %s23, %s26
      %p32 = scmp.eq.s32.totalorder %s13, 0
      %p33 = por %p31, %p32
      %p34 = scmp.ne.s32.totalorder %s23, %s26
      %p35 = scmp.eq.s32.totalorder %s18, 3
      %p36 = por %p34, %p35
      %p37 = scmp.ne.s32.totalorder %s26, %s27
      %p38 = scmp.eq.s32.totalorder %s18, 0
      %p39 = por %p37, %p38
      %p40 = scmp.ne.s32.totalorder %s26, %s27
      %p41 = scmp.eq.s32.totalorder %s19, 3
      %p42 = por %p40, %p41
      %p44 = scmp.ne.s32.totalorder %s27, %s43
      %p45 = scmp.eq.s32.totalorder %s19, 0
      %p46 = por %p44, %p45
      %s47 = ssub.s32 %s13, %s20
      %p48 = scmp.eq.s32.totalorder %s47, 0
      %s50 = sadd.s32 %s49, 1
      %s51 = scalar_select %p48, %s49, %s50
      %p54 = pneg %p48
      %p55 = scmp.eq.s32.totalorder %s13, 3
      %p56 = por %p54, %p55
      %p57 = scmp.ne.s32.totalorder %s49, %s52
      %p58 = scmp.eq.s32.totalorder %s13, 0
      %p59 = por %p57, %p58
      %p60 = scmp.ne.s32.totalorder %s49, %s52
      %p61 = scmp.eq.s32.totalorder %s18, 3
      %p62 = por %p60, %p61
      %p63 = scmp.ne.s32.totalorder %s52, %s53
      %p64 = scmp.eq.s32.totalorder %s18, 0
      %p65 = por %p63, %p64
      %p66 = scmp.ne.s32.totalorder %s52, %s53
      %p67 = scmp.eq.s32.totalorder %s19, 3
      %p68 = por %p66, %p67
      %p70 = scmp.ne.s32.totalorder %s53, %s69
      %p71 = scmp.eq.s32.totalorder %s19, 0
      %p72 = por %p70, %p71
      %p73 = scmp.le.s32.totalorder 1, %s13
      %p74 = scmp.lt.s32.totalorder %s13, 5
      %p75 = pnand %p73, %p74
      %p76 = pneg %p75
      // Predicated region
      $region9: #{tpu_custom_call.1} parent=5 // pred_check
        _
      $region10: #{tpu_custom_call.1} parent=5 // pred_check_branch
        %78 = sbr.rel (%p75) target = $region12
      $region11: #{tpu_custom_call.1} parent=5 // pred_region
        %s79 = ssub.s32 %s13, 1
      $region12: #{tpu_custom_call.1} parent=5 // pred_fallthru
        _
      %p80 = scmp.lt.s32.totalorder %s13, 4
      // Predicated region
      $region13: #{tpu_custom_call.1} parent=5 // pred_check
        %p81 = pneg %p80
      $region14: #{tpu_custom_call.1} parent=5 // pred_check_branch
        %83 = sbr.rel (%p81) target = $region16
      $region15: #{tpu_custom_call.1} parent=5 // pred_region
        // Predicated region
        $region17: #{tpu_custom_call.1} parent=15 // pred_check
          %p84 = pneg %p33
        $region18: #{tpu_custom_call.1} parent=15 // pred_check_branch
          %86 = sbr.rel (%p84) target = $region20
        $region19: #{tpu_custom_call.1} parent=15 // pred_region
          %s87 = sand.u32 %s23, 1
          %s88 = scalar_lea.sflag [#allocation3], %s87
          %s89 = sand.u32 %s23, 1
          %s90 = smul.addr %s89, 24
          %s91 = scalar_lea.vmem [#allocation2], %s90
          %93 = vsyncadd %s88, 0
          %s94 = smul.addr %s13, 8
          %s95 = scalar_lea.hbm %s0, %s94
          %s96 = sshll.u32 %s95, 4
          %s97 = int_to_ptr.hbm [resolvable:$true] %s96
          %s98 = sshll.u32 %s91, 4
          %s99 = int_to_ptr.vmem [resolvable:$true] %s98
          %104 = dma.hbm_to_vmem [thread:$0]  %s97, 384, %s99, %s88, 512, 128, 8
        $region20: #{tpu_custom_call.1} parent=15 // pred_fallthru
          _
      $region16: #{tpu_custom_call.1} parent=5 // pred_fallthru
        _
      %p105 = scmp.le.s32.totalorder 1, %s13
      %p106 = scmp.lt.s32.totalorder %s13, 5
      %p107 = pnand %p105, %p106
      %p108 = pneg %p107
      // Predicated region
      $region21: #{tpu_custom_call.1} parent=5 // pred_check
        _
      $region22: #{tpu_custom_call.1} parent=5 // pred_check_branch
        %110 = sbr.rel (%p107) target = $region24
      $region23: #{tpu_custom_call.1} parent=5 // pred_region
        %s111 = ssub.s32 %s13, 1
        %s112 = sand.u32 %s26, 1
        %s113 = scalar_lea.sflag [#allocation3], %s112
        %s114 = sand.u32 %s26, 1
        %s115 = smul.addr %s114, 24
        %s116 = scalar_lea.vmem [#allocation2], %s115
        // Predicated region
        $region25: #{tpu_custom_call.1} parent=23 // pred_check
          %p117 = pneg %p39
        $region26: #{tpu_custom_call.1} parent=23 // pred_check_branch
          %119 = sbr.rel (%p117) target = $region28
        $region27: #{tpu_custom_call.1} parent=23 // pred_region
          %121 = dma.done %s113, 384
        $region28: #{tpu_custom_call.1} parent=23 // pred_fallthru
          _
        %s122 = sand.u32 %s26, 1
        %s123 = scalar_lea.sflag [#allocation3], %s122
        %s124 = sand.u32 %s26, 1
        %s125 = smul.addr %s124, 24
        %s126 = scalar_lea.vmem [#allocation2], %s125
        %p127 = pneg %p39
        %p128 = pneg %p36
        %p129 = pneg %p65
        %p130 = pneg %p62
        %s131 = sand.u32 %s52, 1
        %s132 = scalar_lea.sflag [#allocation4], %s131
        %s133 = sand.u32 %s52, 1
        %s134 = smul.addr %s133, 40
        %s135 = scalar_lea.vmem [#allocation5], %s134
        %v136 = vld [vmem:[%s116] sm:$0xff]
        %v137 = vld [vmem:[%s116 + $0x8] sm:$0xff]
        %v138 = vld [vmem:[%s116 + $0x10] sm:$0xff]
        %v139 = vmul.f32 %v136, 3.1415927
        %v140 = vmul.f32 %v137, 3.1415927
        %v141 = vand.u32 2147483647, %v139
        %vm142 = vcmp.le.f32.partialorder %v141, 0.7853982
        %vm143 = vcmp.lt.s32.totalorder %v139, 0
        %v144 = vand.u32 %v139, 2139095040
        %v145 = vshrl.u32 %v144, 23
        %v146 = vsub.s32 %v145, 127
        %v147 = vand.u32 2147483647, %v139
        %v148 = vand.u32 %v147, 8388607
        %v149 = vor.u32 %v148, 8388608
        %v150 = vsub.s32 0, %v149
        %v151 = vadd.s32 %v146, 1
        %vm152 = vcmp.gt.s32.totalorder %v151, 0
        %v153 = vsel %vm152, %v151, 0
        %v154 = vshrl.u32 %v153, 5
        %v155 = vand.u32 %v153, 31
        %v156 = vsub.s32 32, %v155
        %v157 = vshrl.u32 683565275, %v156
        %v158 = vshll.u32 683565275, %v155
        %v159 = vshrl.u32 2475754826, %v156
        %v160 = vor.u32 %v158, %v159
        %v161 = vshll.u32 2475754826, %v155
        %v162 = vshrl.u32 2131351028, %v156
        %v163 = vor.u32 %v161, %v162
        %v164 = vshll.u32 2131351028, %v155
        %v165 = vshrl.u32 2102212464, %v156
        %v166 = vor.u32 %v164, %v165
        %v167 = vshll.u32 2102212464, %v155
        %v168 = vshrl.u32 920167782, %v156
        %v169 = vor.u32 %v167, %v168
        %v170 = vshll.u32 920167782, %v155
        %v171 = vshrl.u32 1326507024, %v156
        %v172 = vor.u32 %v170, %v171
        %vm173 = vcmp.lt.s32.totalorder %v154, 1
        %vm174 = vcmp.lt.s32.totalorder %v154, 2
        %vm175 = vcmp.lt.s32.totalorder %v154, 3
        %vm176 = vcmp.lt.s32.totalorder %v154, 4
        %v177 = vsel %vm173, %v157, %v160
        %v178 = vsel %vm176, %v166, 2102212464
        %v179 = vsel %vm175, %v163, %v178
        %v180 = vsel %vm174, %v177, %v179
        %v181 = vsel %vm173, %v160, %v163
        %v182 = vsel %vm176, %v169, 920167782
        %v183 = vsel %vm175, %v166, %v182
        %v184 = vsel %vm174, %v181, %v183
        %v185 = vsel %vm173, %v163, %v166
        %v186 = vsel %vm176, %v172, 1326507024
        %v187 = vsel %vm175, %v169, %v186
        %v188 = vsel %vm174, %v185, %v187
        %v189 = vshll.u32 %v149, 8
        %v190 = vand.u32 %v189, 65535
        %v191 = vshrl.u32 %v189, 16
        %v192 = vand.u32 %v188, 65535
        %v193 = vshrl.u32 %v188, 16
        %v194 = vmul.u32 %v190, %v192
        %v195 = vmul.u32 %v190, %v193
        %v196 = vmul.u32 %v191, %v192
        %v197 = vmul.u32 %v191, %v193
        %v198 = vshll.u32 %v195, 16
        %v199 = vshrl.u32 %v195, 16
        %v200 = vshll.u32 %v196, 16
        %v201 = vshrl.u32 %v196, 16
        %vm202 = vc.u32 %v194, %v198
        %v203 = vsel %vm202, 1, 0
        %v204 = vadd.s32 %v194, %v198
        %v205 = vadd.s32 %v197, %v203
        %vm206 = vc.u32 %v204, %v200
        %v207 = vsel %vm206, 1, 0
        %v208 = vadd.s32 %v204, %v200
        %v209 = vadd.s32 %v205, %v207
        %v210 = vadd.s32 %v209, %v199
        %v211 = vadd.s32 %v210, %v201
        %v212 = vand.u32 %v189, 65535
        %v213 = vshrl.u32 %v189, 16
        %v214 = vand.u32 %v184, 65535
        %v215 = vshrl.u32 %v184, 16
        %v216 = vmul.u32 %v212, %v214
        %v217 = vmul.u32 %v212, %v215
        %v218 = vmul.u32 %v213, %v214
        %v219 = vmul.u32 %v213, %v215
        %v220 = vshll.u32 %v217, 16
        %v221 = vshrl.u32 %v217, 16
        %v222 = vshll.u32 %v218, 16
        %v223 = vshrl.u32 %v218, 16
        %vm224 = vc.u32 %v216, %v220
        %v225 = vsel %vm224, 1, 0
        %v226 = vadd.s32 %v216, %v220
        %v227 = vadd.s32 %v219, %v225
        %vm228 = vc.u32 %v226, %v222
        %v229 = vsel %vm228, 1, 0
        %v230 = vadd.s32 %v226, %v222
        %v231 = vadd.s32 %v227, %v229
        %v232 = vadd.s32 %v231, %v221
        %v233 = vadd.s32 %v232, %v223
        %v234 = vmul.u32 %v189, %v180
        %v235 = vadd.s32 %v211, %v230
        %vm236 = vc.u32 %v211, %v230
        %v237 = vadd.s32 %v233, 1
        %v238 = vsel %vm236, %v237, %v233
        %v239 = vadd.s32 %v234, %v238
        %v240 = vadd.s32 %v239, 536870912
        %v241 = vshrl.u32 %v240, 30
        %v242 = vshll.u32 %v241, 30
        %v243 = vsub.s32 %v239, %v242
        %vm244 = vcmp.lt.s32.totalorder %v243, 0
        %v245 = vsub.s32 0, %v243
        %v246 = vsel %vm244, %v245, %v243
        %v247 = vclz %v246
        %v248 = vsub.s32 %v247, 2
        %vm249 = vcmp.gt.s32.totalorder 0, %v248
        %v250 = vsel %vm249, 0, %v248
        %v251 = vsub.s32 32, %v250
        %v252 = vshll.u32 %v243, %v250
        %v253 = vshrl.u32 %v235, %v251
        %v254 = vor.u32 %v252, %v253
        %v255 = vsub.s32 4294967266, %v250
        %v256 = vadd.s32 %v255, 127
        %v257 = vshll.u32 %v256, 23
        %v258 = vor.u32 4788187, %v257
        %v259 = vand.u32 2147483647, %v258
        %v261 = vcvt.s32.f32 %v254
        %v262 = vmul.f32 %v261, %v259
        %v263 = vxor.u32 %v262, 2147483648
        %v264 = vsel %vm143, %v263, %v262
        %v265 = vsub.s32 4, %v241
        %v266 = vsel %vm143, %v265, %v241
        %v267 = vsel %vm142, %v139, %v264
        %v268 = vsel %vm142, 0, %v266
        %v269 = vmul.f32 %v267, %v267
        %v270 = vmul.f32 %v269, -0.001358992
        %v271 = vadd.f32 %v270, 0.041655596
        %v272 = vmul.f32 %v269, %v271
        %v273 = vadd.f32 %v272, -0.4999988
        %v274 = vmul.f32 %v269, %v273
        %v275 = vadd.f32 1.0, %v274
        %v276 = vmul.f32 %v267, %v267
        %v277 = vmul.f32 %v276, -0.00019511016
        %v278 = vadd.f32 %v277, 0.008332121
        %v279 = vmul.f32 %v276, %v278
        %v280 = vadd.f32 %v279, -0.16666654
        %v281 = vmul.f32 %v276, %v280
        %v282 = vadd.f32 %v281, 1.0
        %v283 = vmul.f32 %v282, %v267
        %vm284 = vweird.f32 %v139
        %v285 = vadd.s32 %v268, 3
        %v286 = vand.u32 %v285, 3
        %vm287 = vcmp.lt.s32.totalorder %v286, 2
        %vm288 = vcmp.eq.s32.totalorder %v286, 0
        %v289 = vxor.u32 %v283, 2147483648
        %v290 = vsel %vm288, %v275, %v289
        %vm291 = vcmp.eq.s32.totalorder %v286, 2
        %v292 = vxor.u32 %v275, 2147483648
        %v293 = vsel %vm291, %v292, %v283
        %v294 = vsel %vm287, %v290, %v293
        %v295 = vsel %vm284, nan, %v294
        %v296 = vand.u32 2147483647, %v139
        %vm297 = vcmp.le.f32.partialorder %v296, 0.7853982
        %vm298 = vcmp.lt.s32.totalorder %v139, 0
        %v299 = vand.u32 %v139, 2139095040
        %v300 = vshrl.u32 %v299, 23
        %v301 = vsub.s32 %v300, 127
        %v302 = vand.u32 2147483647, %v139
        %v303 = vand.u32 %v302, 8388607
        %v304 = vor.u32 %v303, 8388608
        %v305 = vsub.s32 0, %v304
        %v306 = vadd.s32 %v301, 1
        %vm307 = vcmp.gt.s32.totalorder %v306, 0
        %v308 = vsel %vm307, %v306, 0
        %v309 = vshrl.u32 %v308, 5
        %v310 = vand.u32 %v308, 31
        %v311 = vsub.s32 32, %v310
        %v312 = vshrl.u32 683565275, %v311
        %v313 = vshll.u32 683565275, %v310
        %v314 = vshrl.u32 2475754826, %v311
        %v315 = vor.u32 %v313, %v314
        %v316 = vshll.u32 2475754826, %v310
        %v317 = vshrl.u32 2131351028, %v311
        %v318 = vor.u32 %v316, %v317
        %v319 = vshll.u32 2131351028, %v310
        %v320 = vshrl.u32 2102212464, %v311
        %v321 = vor.u32 %v319, %v320
        %v322 = vshll.u32 2102212464, %v310
        %v323 = vshrl.u32 920167782, %v311
        %v324 = vor.u32 %v322, %v323
        %v325 = vshll.u32 920167782, %v310
        %v326 = vshrl.u32 1326507024, %v311
        %v327 = vor.u32 %v325, %v326
        %vm328 = vcmp.lt.s32.totalorder %v309, 1
        %vm329 = vcmp.lt.s32.totalorder %v309, 2
        %vm330 = vcmp.lt.s32.totalorder %v309, 3
        %vm331 = vcmp.lt.s32.totalorder %v309, 4
        %v332 = vsel %vm328, %v312, %v315
        %v333 = vsel %vm331, %v321, 2102212464
        %v334 = vsel %vm330, %v318, %v333
        %v335 = vsel %vm329, %v332, %v334
        %v336 = vsel %vm328, %v315, %v318
        %v337 = vsel %vm331, %v324, 920167782
        %v338 = vsel %vm330, %v321, %v337
        %v339 = vsel %vm329, %v336, %v338
        %v340 = vsel %vm328, %v318, %v321
        %v341 = vsel %vm331, %v327, 1326507024
        %v342 = vsel %vm330, %v324, %v341
        %v343 = vsel %vm329, %v340, %v342
        %v344 = vshll.u32 %v304, 8
        %v345 = vand.u32 %v344, 65535
        %v346 = vshrl.u32 %v344, 16
        %v347 = vand.u32 %v343, 65535
        %v348 = vshrl.u32 %v343, 16
        %v349 = vmul.u32 %v345, %v347
        %v350 = vmul.u32 %v345, %v348
        %v351 = vmul.u32 %v346, %v347
        %v352 = vmul.u32 %v346, %v348
        %v353 = vshll.u32 %v350, 16
        %v354 = vshrl.u32 %v350, 16
        %v355 = vshll.u32 %v351, 16
        %v356 = vshrl.u32 %v351, 16
        %vm357 = vc.u32 %v349, %v353
        %v358 = vsel %vm357, 1, 0
        %v359 = vadd.s32 %v349, %v353
        %v360 = vadd.s32 %v352, %v358
        %vm361 = vc.u32 %v359, %v355
        %v362 = vsel %vm361, 1, 0
        %v363 = vadd.s32 %v359, %v355
        %v364 = vadd.s32 %v360, %v362
        %v365 = vadd.s32 %v364, %v354
        %v366 = vadd.s32 %v365, %v356
        %v367 = vand.u32 %v344, 65535
        %v368 = vshrl.u32 %v344, 16
        %v369 = vand.u32 %v339, 65535
        %v370 = vshrl.u32 %v339, 16
        %v371 = vmul.u32 %v367, %v369
        %v372 = vmul.u32 %v367, %v370
        %v373 = vmul.u32 %v368, %v369
        %v374 = vmul.u32 %v368, %v370
        %v375 = vshll.u32 %v372, 16
        %v376 = vshrl.u32 %v372, 16
        %v377 = vshll.u32 %v373, 16
        %v378 = vshrl.u32 %v373, 16
        %vm379 = vc.u32 %v371, %v375
        %v380 = vsel %vm379, 1, 0
        %v381 = vadd.s32 %v371, %v375
        %v382 = vadd.s32 %v374, %v380
        %vm383 = vc.u32 %v381, %v377
        %v384 = vsel %vm383, 1, 0
        %v385 = vadd.s32 %v381, %v377
        %v386 = vadd.s32 %v382, %v384
        %v387 = vadd.s32 %v386, %v376
        %v388 = vadd.s32 %v387, %v378
        %v389 = vmul.u32 %v344, %v335
        %v390 = vadd.s32 %v366, %v385
        %vm391 = vc.u32 %v366, %v385
        %v392 = vadd.s32 %v388, 1
        %v393 = vsel %vm391, %v392, %v388
        %v394 = vadd.s32 %v389, %v393
        %v395 = vadd.s32 %v394, 536870912
        %v396 = vshrl.u32 %v395, 30
        %v397 = vshll.u32 %v396, 30
        %v398 = vsub.s32 %v394, %v397
        %vm399 = vcmp.lt.s32.totalorder %v398, 0
        %v400 = vsub.s32 0, %v398
        %v401 = vsel %vm399, %v400, %v398
        %v402 = vclz %v401
        %v403 = vsub.s32 %v402, 2
        %vm404 = vcmp.gt.s32.totalorder 0, %v403
        %v405 = vsel %vm404, 0, %v403
        %v406 = vsub.s32 32, %v405
        %v407 = vshll.u32 %v398, %v405
        %v408 = vshrl.u32 %v390, %v406
        %v409 = vor.u32 %v407, %v408
        %v410 = vsub.s32 4294967266, %v405
        %v411 = vadd.s32 %v410, 127
        %v412 = vshll.u32 %v411, 23
        %v413 = vor.u32 4788187, %v412
        %v414 = vand.u32 2147483647, %v413
        %v416 = vcvt.s32.f32 %v409
        %v417 = vmul.f32 %v416, %v414
        %v418 = vxor.u32 %v417, 2147483648
        %v419 = vsel %vm298, %v418, %v417
        %v420 = vsub.s32 4, %v396
        %v421 = vsel %vm298, %v420, %v396
        %v422 = vsel %vm297, %v139, %v419
        %v423 = vsel %vm297, 0, %v421
        %v424 = vmul.f32 %v422, %v422
        %v425 = vmul.f32 %v424, -0.001358992
        %v426 = vadd.f32 %v425, 0.041655596
        %v427 = vmul.f32 %v424, %v426
        %v428 = vadd.f32 %v427, -0.4999988
        %v429 = vmul.f32 %v424, %v428
        %v430 = vadd.f32 1.0, %v429
        %v431 = vmul.f32 %v422, %v422
        %v432 = vmul.f32 %v431, -0.00019511016
        %v433 = vadd.f32 %v432, 0.008332121
        %v434 = vmul.f32 %v431, %v433
        %v435 = vadd.f32 %v434, -0.16666654
        %v436 = vmul.f32 %v431, %v435
        %v437 = vadd.f32 %v436, 1.0
        %v438 = vmul.f32 %v437, %v422
        %vm439 = vweird.f32 %v139
        %v440 = vand.u32 %v423, 3
        %vm441 = vcmp.lt.s32.totalorder %v440, 2
        %vm442 = vcmp.eq.s32.totalorder %v440, 0
        %v443 = vxor.u32 %v438, 2147483648
        %v444 = vsel %vm442, %v430, %v443
        %vm445 = vcmp.eq.s32.totalorder %v440, 2
        %v446 = vxor.u32 %v430, 2147483648
        %v447 = vsel %vm445, %v446, %v438
        %v448 = vsel %vm441, %v444, %v447
        %v449 = vsel %vm439, nan, %v448
        %v450 = vand.u32 2147483647, %v140
        %vm451 = vcmp.le.f32.partialorder %v450, 0.7853982
        %vm452 = vcmp.lt.s32.totalorder %v140, 0
        %v453 = vand.u32 %v140, 2139095040
        %v454 = vshrl.u32 %v453, 23
        %v455 = vsub.s32 %v454, 127
        %v456 = vand.u32 2147483647, %v140
        %v457 = vand.u32 %v456, 8388607
        %v458 = vor.u32 %v457, 8388608
        %v459 = vsub.s32 0, %v458
        %v460 = vadd.s32 %v455, 1
        %vm461 = vcmp.gt.s32.totalorder %v460, 0
        %v462 = vsel %vm461, %v460, 0
        %v463 = vshrl.u32 %v462, 5
        %v464 = vand.u32 %v462, 31
        %v465 = vsub.s32 32, %v464
        %v466 = vshrl.u32 683565275, %v465
        %v467 = vshll.u32 683565275, %v464
        %v468 = vshrl.u32 2475754826, %v465
        %v469 = vor.u32 %v467, %v468
        %v470 = vshll.u32 2475754826, %v464
        %v471 = vshrl.u32 2131351028, %v465
        %v472 = vor.u32 %v470, %v471
        %v473 = vshll.u32 2131351028, %v464
        %v474 = vshrl.u32 2102212464, %v465
        %v475 = vor.u32 %v473, %v474
        %v476 = vshll.u32 2102212464, %v464
        %v477 = vshrl.u32 920167782, %v465
        %v478 = vor.u32 %v476, %v477
        %v479 = vshll.u32 920167782, %v464
        %v480 = vshrl.u32 1326507024, %v465
        %v481 = vor.u32 %v479, %v480
        %vm482 = vcmp.lt.s32.totalorder %v463, 1
        %vm483 = vcmp.lt.s32.totalorder %v463, 2
        %vm484 = vcmp.lt.s32.totalorder %v463, 3
        %vm485 = vcmp.lt.s32.totalorder %v463, 4
        %v486 = vsel %vm482, %v466, %v469
        %v487 = vsel %vm485, %v475, 2102212464
        %v488 = vsel %vm484, %v472, %v487
        %v489 = vsel %vm483, %v486, %v488
        %v490 = vsel %vm482, %v469, %v472
        %v491 = vsel %vm485, %v478, 920167782
        %v492 = vsel %vm484, %v475, %v491
        %v493 = vsel %vm483, %v490, %v492
        %v494 = vsel %vm482, %v472, %v475
        %v495 = vsel %vm485, %v481, 1326507024
        %v496 = vsel %vm484, %v478, %v495
        %v497 = vsel %vm483, %v494, %v496
        %v498 = vshll.u32 %v458, 8
        %v499 = vand.u32 %v498, 65535
        %v500 = vshrl.u32 %v498, 16
        %v501 = vand.u32 %v497, 65535
        %v502 = vshrl.u32 %v497, 16
        %v503 = vmul.u32 %v499, %v501
        %v504 = vmul.u32 %v499, %v502
        %v505 = vmul.u32 %v500, %v501
        %v506 = vmul.u32 %v500, %v502
        %v507 = vshll.u32 %v504, 16
        %v508 = vshrl.u32 %v504, 16
        %v509 = vshll.u32 %v505, 16
        %v510 = vshrl.u32 %v505, 16
        %vm511 = vc.u32 %v503, %v507
        %v512 = vsel %vm511, 1, 0
        %v513 = vadd.s32 %v503, %v507
        %v514 = vadd.s32 %v506, %v512
        %vm515 = vc.u32 %v513, %v509
        %v516 = vsel %vm515, 1, 0
        %v517 = vadd.s32 %v513, %v509
        %v518 = vadd.s32 %v514, %v516
        %v519 = vadd.s32 %v518, %v508
        %v520 = vadd.s32 %v519, %v510
        %v521 = vand.u32 %v498, 65535
        %v522 = vshrl.u32 %v498, 16
        %v523 = vand.u32 %v493, 65535
        %v524 = vshrl.u32 %v493, 16
        %v525 = vmul.u32 %v521, %v523
        %v526 = vmul.u32 %v521, %v524
        %v527 = vmul.u32 %v522, %v523
        %v528 = vmul.u32 %v522, %v524
        %v529 = vshll.u32 %v526, 16
        %v530 = vshrl.u32 %v526, 16
        %v531 = vshll.u32 %v527, 16
        %v532 = vshrl.u32 %v527, 16
        %vm533 = vc.u32 %v525, %v529
        %v534 = vsel %vm533, 1, 0
        %v535 = vadd.s32 %v525, %v529
        %v536 = vadd.s32 %v528, %v534
        %vm537 = vc.u32 %v535, %v531
        %v538 = vsel %vm537, 1, 0
        %v539 = vadd.s32 %v535, %v531
        %v540 = vadd.s32 %v536, %v538
        %v541 = vadd.s32 %v540, %v530
        %v542 = vadd.s32 %v541, %v532
        %v543 = vmul.u32 %v498, %v489
        %v544 = vadd.s32 %v520, %v539
        %vm545 = vc.u32 %v520, %v539
        %v546 = vadd.s32 %v542, 1
        %v547 = vsel %vm545, %v546, %v542
        %v548 = vadd.s32 %v543, %v547
        %v549 = vadd.s32 %v548, 536870912
        %v550 = vshrl.u32 %v549, 30
        %v551 = vshll.u32 %v550, 30
        %v552 = vsub.s32 %v548, %v551
        %vm553 = vcmp.lt.s32.totalorder %v552, 0
        %v554 = vsub.s32 0, %v552
        %v555 = vsel %vm553, %v554, %v552
        %v556 = vclz %v555
        %v557 = vsub.s32 %v556, 2
        %vm558 = vcmp.gt.s32.totalorder 0, %v557
        %v559 = vsel %vm558, 0, %v557
        %v560 = vsub.s32 32, %v559
        %v561 = vshll.u32 %v552, %v559
        %v562 = vshrl.u32 %v544, %v560
        %v563 = vor.u32 %v561, %v562
        %v564 = vsub.s32 4294967266, %v559
        %v565 = vadd.s32 %v564, 127
        %v566 = vshll.u32 %v565, 23
        %v567 = vor.u32 4788187, %v566
        %v568 = vand.u32 2147483647, %v567
        %v570 = vcvt.s32.f32 %v563
        %v571 = vmul.f32 %v570, %v568
        %v572 = vxor.u32 %v571, 2147483648
        %v573 = vsel %vm452, %v572, %v571
        %v574 = vsub.s32 4, %v550
        %v575 = vsel %vm452, %v574, %v550
        %v576 = vsel %vm451, %v140, %v573
        %v577 = vsel %vm451, 0, %v575
        %v578 = vmul.f32 %v576, %v576
        %v579 = vmul.f32 %v578, -0.001358992
        %v580 = vadd.f32 %v579, 0.041655596
        %v581 = vmul.f32 %v578, %v580
        %v582 = vadd.f32 %v581, -0.4999988
        %v583 = vmul.f32 %v578, %v582
        %v584 = vadd.f32 1.0, %v583
        %v585 = vmul.f32 %v576, %v576
        %v586 = vmul.f32 %v585, -0.00019511016
        %v587 = vadd.f32 %v586, 0.008332121
        %v588 = vmul.f32 %v585, %v587
        %v589 = vadd.f32 %v588, -0.16666654
        %v590 = vmul.f32 %v585, %v589
        %v591 = vadd.f32 %v590, 1.0
        %v592 = vmul.f32 %v591, %v576
        %vm593 = vweird.f32 %v140
        %v594 = vadd.s32 %v577, 3
        %v595 = vand.u32 %v594, 3
        %vm596 = vcmp.lt.s32.totalorder %v595, 2
        %vm597 = vcmp.eq.s32.totalorder %v595, 0
        %v598 = vxor.u32 %v592, 2147483648
        %v599 = vsel %vm597, %v584, %v598
        %vm600 = vcmp.eq.s32.totalorder %v595, 2
        %v601 = vxor.u32 %v584, 2147483648
        %v602 = vsel %vm600, %v601, %v592
        %v603 = vsel %vm596, %v599, %v602
        %v604 = vsel %vm593, nan, %v603
        %v605 = vand.u32 2147483647, %v140
        %vm606 = vcmp.le.f32.partialorder %v605, 0.7853982
        %vm607 = vcmp.lt.s32.totalorder %v140, 0
        %v608 = vand.u32 %v140, 2139095040
        %v609 = vshrl.u32 %v608, 23
        %v610 = vsub.s32 %v609, 127
        %v611 = vand.u32 2147483647, %v140
        %v612 = vand.u32 %v611, 8388607
        %v613 = vor.u32 %v612, 8388608
        %v614 = vsub.s32 0, %v613
        %v615 = vadd.s32 %v610, 1
        %vm616 = vcmp.gt.s32.totalorder %v615, 0
        %v617 = vsel %vm616, %v615, 0
        %v618 = vshrl.u32 %v617, 5
        %v619 = vand.u32 %v617, 31
        %v620 = vsub.s32 32, %v619
        %v621 = vshrl.u32 683565275, %v620
        %v622 = vshll.u32 683565275, %v619
        %v623 = vshrl.u32 2475754826, %v620
        %v624 = vor.u32 %v622, %v623
        %v625 = vshll.u32 2475754826, %v619
        %v626 = vshrl.u32 2131351028, %v620
        %v627 = vor.u32 %v625, %v626
        %v628 = vshll.u32 2131351028, %v619
        %v629 = vshrl.u32 2102212464, %v620
        %v630 = vor.u32 %v628, %v629
        %v631 = vshll.u32 2102212464, %v619
        %v632 = vshrl.u32 920167782, %v620
        %v633 = vor.u32 %v631, %v632
        %v634 = vshll.u32 920167782, %v619
        %v635 = vshrl.u32 1326507024, %v620
        %v636 = vor.u32 %v634, %v635
        %vm637 = vcmp.lt.s32.totalorder %v618, 1
        %vm638 = vcmp.lt.s32.totalorder %v618, 2
        %vm639 = vcmp.lt.s32.totalorder %v618, 3
        %vm640 = vcmp.lt.s32.totalorder %v618, 4
        %v641 = vsel %vm637, %v621, %v624
        %v642 = vsel %vm640, %v630, 2102212464
        %v643 = vsel %vm639, %v627, %v642
        %v644 = vsel %vm638, %v641, %v643
        %v645 = vsel %vm637, %v624, %v627
        %v646 = vsel %vm640, %v633, 920167782
        %v647 = vsel %vm639, %v630, %v646
        %v648 = vsel %vm638, %v645, %v647
        %v649 = vsel %vm637, %v627, %v630
        %v650 = vsel %vm640, %v636, 1326507024
        %v651 = vsel %vm639, %v633, %v650
        %v652 = vsel %vm638, %v649, %v651
        %v653 = vshll.u32 %v613, 8
        %v654 = vand.u32 %v653, 65535
        %v655 = vshrl.u32 %v653, 16
        %v656 = vand.u32 %v652, 65535
        %v657 = vshrl.u32 %v652, 16
        %v658 = vmul.u32 %v654, %v656
        %v659 = vmul.u32 %v654, %v657
        %v660 = vmul.u32 %v655, %v656
        %v661 = vmul.u32 %v655, %v657
        %v662 = vshll.u32 %v659, 16
        %v663 = vshrl.u32 %v659, 16
        %v664 = vshll.u32 %v660, 16
        %v665 = vshrl.u32 %v660, 16
        %vm666 = vc.u32 %v658, %v662
        %v667 = vsel %vm666, 1, 0
        %v668 = vadd.s32 %v658, %v662
        %v669 = vadd.s32 %v661, %v667
        %vm670 = vc.u32 %v668, %v664
        %v671 = vsel %vm670, 1, 0
        %v672 = vadd.s32 %v668, %v664
        %v673 = vadd.s32 %v669, %v671
        %v674 = vadd.s32 %v673, %v663
        %v675 = vadd.s32 %v674, %v665
        %v676 = vand.u32 %v653, 65535
        %v677 = vshrl.u32 %v653, 16
        %v678 = vand.u32 %v648, 65535
        %v679 = vshrl.u32 %v648, 16
        %v680 = vmul.u32 %v676, %v678
        %v681 = vmul.u32 %v676, %v679
        %v682 = vmul.u32 %v677, %v678
        %v683 = vmul.u32 %v677, %v679
        %v684 = vshll.u32 %v681, 16
        %v685 = vshrl.u32 %v681, 16
        %v686 = vshll.u32 %v682, 16
        %v687 = vshrl.u32 %v682, 16
        %vm688 = vc.u32 %v680, %v684
        %v689 = vsel %vm688, 1, 0
        %v690 = vadd.s32 %v680, %v684
        %v691 = vadd.s32 %v683, %v689
        %vm692 = vc.u32 %v690, %v686
        %v693 = vsel %vm692, 1, 0
        %v694 = vadd.s32 %v690, %v686
        %v695 = vadd.s32 %v691, %v693
        %v696 = vadd.s32 %v695, %v685
        %v697 = vadd.s32 %v696, %v687
        %v698 = vmul.u32 %v653, %v644
        %v699 = vadd.s32 %v675, %v694
        %vm700 = vc.u32 %v675, %v694
        %v701 = vadd.s32 %v697, 1
        %v702 = vsel %vm700, %v701, %v697
        %v703 = vadd.s32 %v698, %v702
        %v704 = vadd.s32 %v703, 536870912
        %v705 = vshrl.u32 %v704, 30
        %v706 = vshll.u32 %v705, 30
        %v707 = vsub.s32 %v703, %v706
        %vm708 = vcmp.lt.s32.totalorder %v707, 0
        %v709 = vsub.s32 0, %v707
        %v710 = vsel %vm708, %v709, %v707
        %v711 = vclz %v710
        %v712 = vsub.s32 %v711, 2
        %vm713 = vcmp.gt.s32.totalorder 0, %v712
        %v714 = vsel %vm713, 0, %v712
        %v715 = vsub.s32 32, %v714
        %v716 = vshll.u32 %v707, %v714
        %v717 = vshrl.u32 %v699, %v715
        %v718 = vor.u32 %v716, %v717
        %v719 = vsub.s32 4294967266, %v714
        %v720 = vadd.s32 %v719, 127
        %v721 = vshll.u32 %v720, 23
        %v722 = vor.u32 4788187, %v721
        %v723 = vand.u32 2147483647, %v722
        %v725 = vcvt.s32.f32 %v718
        %v726 = vmul.f32 %v725, %v723
        %v727 = vxor.u32 %v726, 2147483648
        %v728 = vsel %vm607, %v727, %v726
        %v729 = vsub.s32 4, %v705
        %v730 = vsel %vm607, %v729, %v705
        %v731 = vsel %vm606, %v140, %v728
        %v732 = vsel %vm606, 0, %v730
        %v733 = vmul.f32 %v731, %v731
        %v734 = vmul.f32 %v733, -0.001358992
        %v735 = vadd.f32 %v734, 0.041655596
        %v736 = vmul.f32 %v733, %v735
        %v737 = vadd.f32 %v736, -0.4999988
        %v738 = vmul.f32 %v733, %v737
        %v739 = vadd.f32 1.0, %v738
        %v740 = vmul.f32 %v731, %v731
        %v741 = vmul.f32 %v740, -0.00019511016
        %v742 = vadd.f32 %v741, 0.008332121
        %v743 = vmul.f32 %v740, %v742
        %v744 = vadd.f32 %v743, -0.16666654
        %v745 = vmul.f32 %v740, %v744
        %v746 = vadd.f32 %v745, 1.0
        %v747 = vmul.f32 %v746, %v731
        %vm748 = vweird.f32 %v140
        %v749 = vand.u32 %v732, 3
        %vm750 = vcmp.lt.s32.totalorder %v749, 2
        %vm751 = vcmp.eq.s32.totalorder %v749, 0
        %v752 = vxor.u32 %v747, 2147483648
        %v753 = vsel %vm751, %v739, %v752
        %vm754 = vcmp.eq.s32.totalorder %v749, 2
        %v755 = vxor.u32 %v739, 2147483648
        %v756 = vsel %vm754, %v755, %v747
        %v757 = vsel %vm750, %v753, %v756
        %v758 = vsel %vm748, nan, %v757
        %759 = vst [vmem:[%s135] sm:$0xff] %v295
        %760 = vst [vmem:[%s135 + $0x8] sm:$0xff] %v449
        %761 = vst [vmem:[%s135 + $0x10] sm:$0xff] %v604
        %762 = vst [vmem:[%s135 + $0x18] sm:$0xff] %v758
        %763 = vst [vmem:[%s135 + $0x20] sm:$0xff] %v138
        %s764 = sand.u32 %s52, 1
        %s765 = scalar_lea.sflag [#allocation4], %s764
        %s766 = sand.u32 %s52, 1
        %s767 = smul.addr %s766, 40
        %s768 = scalar_lea.vmem [#allocation5], %s767
        // Predicated region
        $region29: #{tpu_custom_call.1} parent=23 // pred_check
          %p769 = pneg %p62
        $region30: #{tpu_custom_call.1} parent=23 // pred_check_branch
          %771 = sbr.rel (%p769) target = $region32
        $region31: #{tpu_custom_call.1} parent=23 // pred_region
          %773 = vsyncadd %s765, 0
          %s774 = smul.addr %s18, 8
          %s775 = scalar_lea.hbm %s1, %s774
          %s776 = sshll.u32 %s768, 4
          %s777 = int_to_ptr.vmem [resolvable:$true] %s776
          %s778 = sshll.u32 %s775, 4
          %s779 = int_to_ptr.hbm [resolvable:$true] %s778
          %784 = dma.vmem_to_hbm [thread:$0]  %s777, 640, %s779, %s765, 128, 512, 8
        $region32: #{tpu_custom_call.1} parent=23 // pred_fallthru
          _
      $region24: #{tpu_custom_call.1} parent=5 // pred_fallthru
        _
      %p785 = scmp.le.s32.totalorder 2, %s13
      // Predicated region
      $region33: #{tpu_custom_call.1} parent=5 // pred_check
        %p786 = pneg %p785
      $region34: #{tpu_custom_call.1} parent=5 // pred_check_branch
        %788 = sbr.rel (%p786) target = $region36
      $region35: #{tpu_custom_call.1} parent=5 // pred_region
        %s789 = ssub.s32 %s13, 2
        // Predicated region
        $region37: #{tpu_custom_call.1} parent=35 // pred_check
          %p790 = pneg %p68
        $region38: #{tpu_custom_call.1} parent=35 // pred_check_branch
          %792 = sbr.rel (%p790) target = $region40
        $region39: #{tpu_custom_call.1} parent=35 // pred_region
          %s793 = sand.u32 %s53, 1
          %s794 = scalar_lea.sflag [#allocation4], %s793
          %s795 = sand.u32 %s53, 1
          %s796 = smul.addr %s795, 40
          %s797 = scalar_lea.vmem [#allocation5], %s796
          %799 = dma.done %s794, 640
        $region40: #{tpu_custom_call.1} parent=35 // pred_fallthru
          _
      $region36: #{tpu_custom_call.1} parent=5 // pred_fallthru
        _
    $region6: #{tpu_custom_call.1} parent=1 // loop_footer
      %s17 = sadd.s32 1, %s13
    $region7: #{tpu_custom_call.1} parent=1 // loop_footer_branch
      %12 = sbr.rel target = $region3
    $region8: #{tpu_custom_call.1} parent=1 // loop_exit
      _
    %800 = vsyncpa [#allocation3], 1
    %s801 = scalar_lea.sflag [#allocation3], 1
    %802 = vsyncpa %s801, 1
    %803 = vsyncpa [#allocation4], 1
    %s804 = scalar_lea.sflag [#allocation4], 1
    %805 = vsyncpa %s804, 1

</llo_original>
